<compile_context>
chip_gen: v5e
topology: v5e:2x2
jax: 0.10.0
libtpu: 0.0.40
codegen_flags: <defaults>
</compile_context>

<pallas_src>
import jax
import jax.numpy as jnp
from jax.experimental import pallas as pl
from jax.experimental.pallas import tpu as pltpu

_LANES = 128
_SUBLANES = 8
_DEFAULT_BLOCK_ROWS = 2048   # 1 MiB f32 per input tile
_MAX_BLOCK_ROWS = 4096       # 2 inputs x 2 buffers x tile <= 8 MiB (v5e-safe)


def make_contrastive_loss(batch: int, margin: float = 2.0,
                          block_rows: int = _DEFAULT_BLOCK_ROWS):
    """Builds a Pallas-backed contrastive-loss callable for a fixed batch size."""
    margin = float(margin)
    inv_denom = float(batch)
    rows = max(pl.cdiv(batch, _LANES), 1)
    # Keep block second-minor dim a multiple of 16 (covers f32 (8,128) and
    # bf16 (16,128) sublane packing); cap per VMEM budget.
    block_rows = max((min(int(block_rows), _MAX_BLOCK_ROWS) // 16) * 16, 16)

    def elementwise(d_raw, l_raw):
        # Upcast immediately after the load (bf16 inputs stream at half bytes).
        d = d_raw.astype(jnp.float32)
        lab = l_raw.astype(jnp.float32)
        d2 = d * d
        hinge = jnp.maximum(margin - d, 0.0)
        # (1-l)*d^2 + l*hinge^2 == d^2 + l*(hinge^2 - d^2)   (exact for any l)
        return d2 + lab * (hinge * hinge - d2)

    if rows <= block_rows:
        # ------- Path A: whole input is a single tile; one grid step. -------
        def kernel(d_ref, l_ref, o_ref):
            contrib = elementwise(d_ref[...], l_ref[...])
            o_ref[...] = jnp.zeros_like(o_ref) + jnp.sum(contrib) / inv_denom

        cost = pl.CostEstimate(flops=8 * rows * _LANES, transcendentals=0,
                               bytes_accessed=2 * rows * _LANES * 4 + 4)
        call = pl.pallas_call(
            kernel,
            out_shape=jax.ShapeDtypeStruct((1, 1), jnp.float32),
            grid_spec=pltpu.PrefetchScalarGridSpec(
                num_scalar_prefetch=0,
                grid=(1,),
                in_specs=[pl.BlockSpec((rows, _LANES), lambda i: (0, 0)),
                          pl.BlockSpec((rows, _LANES), lambda i: (0, 0))],
                out_specs=pl.BlockSpec((1, 1), lambda i: (0, 0)),
            ),
            compiler_params=pltpu.CompilerParams(
                dimension_semantics=("arbitrary",)),
            cost_estimate=cost,
        )

        def run(d2d, l2d):
            return call(d2d, l2d)

    else:
        # ------- Path B: multi-block grid, resident (8,128) accumulator. -------
        num_blocks = pl.cdiv(rows, block_rows)
        needs_mask = (rows % block_rows) != 0
        # v7x megacore: split even block counts across both TensorCores.
        # TODO(synk): odd block counts fall back to a single core; a clamped
        # index_map + full masking would generalize the split.
        num_cores = 2 if (num_blocks % 2 == 0 and num_blocks >= 2) else 1
        bpc = num_blocks // num_cores

        def kernel(d_ref, l_ref, o_ref):
            c = pl.program_id(0)
            i = pl.program_id(1)

            @pl.when(i == 0)
            def _init():
                o_ref[...] = jnp.zeros_like(o_ref)

            contrib = elementwise(d_ref[...], l_ref[...])
            if needs_mask:
                row = jax.lax.broadcasted_iota(jnp.int32, (block_rows, _LANES), 0)
                valid = (c * bpc + i) * block_rows + row < rows
                contrib = jnp.where(valid, contrib, 0.0)
            # Pure VALU vreg adds into the resident (8,128) output block; the
            # single cross-lane/sublane reduce is deferred to the wrapper.
            o_ref[...] += contrib.reshape(-1, _SUBLANES, _LANES).sum(axis=0)

        in_idx = lambda c, i: (c * bpc + i, 0)
        tile_bytes = block_rows * _LANES * 4      # f32 worst case
        cost = pl.CostEstimate(
            flops=8 * rows * _LANES, transcendentals=0,
            bytes_accessed=2 * rows * _LANES * 4 + num_cores * _SUBLANES * _LANES * 4)
        call = pl.pallas_call(
            kernel,
            out_shape=jax.ShapeDtypeStruct((num_cores * _SUBLANES, _LANES),
                                           jnp.float32),
            grid_spec=pltpu.PrefetchScalarGridSpec(
                num_scalar_prefetch=0,
                grid=(num_cores, bpc),
                in_specs=[pl.BlockSpec((block_rows, _LANES), in_idx),
                          pl.BlockSpec((block_rows, _LANES), in_idx)],
                out_specs=pl.BlockSpec((_SUBLANES, _LANES), lambda c, i: (c, 0)),
            ),
            compiler_params=pltpu.CompilerParams(
                dimension_semantics=("parallel", "arbitrary"),
                vmem_limit_bytes=2 * 2 * tile_bytes + (4 << 20),
            ),
            cost_estimate=cost,
        )

        def run(d2d, l2d):
            partials = call(d2d, l2d)              # (num_cores*8, 128) f32
            return (jnp.sum(partials) / inv_denom).reshape(1, 1)

    @jax.jit
    def contrastive_loss(distance, label):
        compute_dtype = (jnp.bfloat16 if distance.dtype == jnp.bfloat16
                         else jnp.float32)
        d = distance.reshape(-1).astype(compute_dtype)
        lab = label.reshape(-1).astype(compute_dtype)
        pad = rows * _LANES - batch               # <= 127, only if B % 128 != 0
        if pad:
            d = jnp.pad(d, (0, pad))
            lab = jnp.pad(lab, (0, pad))
        return run(d.reshape(rows, _LANES), lab.reshape(rows, _LANES))

    return contrastive_loss


def reference_loss(distance, label, margin=2.0):
    """Pure-JAX reference mirroring the PyTorch forward exactly."""
    d2 = jnp.power(distance, 2)
    h2 = jnp.power(jnp.maximum(margin - distance, 0.0), 2)
    temp = jnp.matmul((1.0 - label).T, d2) + jnp.matmul(label.T, h2)
    return temp / label.shape[0]


def _check(out, ref, name):
    out = jax.block_until_ready(out)
    assert out.shape == (1, 1), (name, out.shape)
    assert jnp.allclose(out, ref, rtol=1e-4, atol=1e-5), (name, out, ref)


if __name__ == "__main__":
    margin = 2.0
    keys = jax.random.split(jax.random.PRNGKey(0), 10)

    def make_inputs(kd, kl, b):
        d = jnp.abs(jax.random.normal(kd, (b, 1), dtype=jnp.float32)) * 1.5
        l = jax.random.bernoulli(kl, 0.5, (b, 1)).astype(jnp.float32)
        return d, l

    # Case 1: tiny batch (B=8) -> single-tile fast path (Path A).
    d1, l1 = make_inputs(keys[0], keys[1], 8)
    _check(make_contrastive_loss(8, margin)(d1, l1),
           reference_loss(d1, l1, margin), "B=8")

    # Case 2: B=4096, block_rows=16 -> 2 blocks, 2-core split, no mask, no pad.
    loss_4096 = make_contrastive_loss(4096, margin, block_rows=16)
    d2, l2 = make_inputs(keys[2], keys[3], 4096)
    _check(loss_4096(d2, l2), reference_loss(d2, l2, margin), "B=4096 f32")

    # Case 3: B=3000 -> 24 rows, partial last block (in-kernel mask) + 72-elem pad.
    d3, l3 = make_inputs(keys[4], keys[5], 3000)
    _check(make_contrastive_loss(3000, margin, block_rows=16)(d3, l3),
           reference_loss(d3, l3, margin), "B=3000 masked")

    # Case 4: B=6144 -> 3 blocks (odd) -> single-core multi-block path.
    d4, l4 = make_inputs(keys[6], keys[7], 6144)
    _check(make_contrastive_loss(6144, margin, block_rows=16)(d4, l4),
           reference_loss(d4, l4, margin), "B=6144 odd-blocks")

    # Case 5: bf16 streaming path (half HBM bytes, in-kernel upcast to f32).
    d5 = d2.astype(jnp.bfloat16)
    l5 = l2.astype(jnp.bfloat16)
    ref5 = reference_loss(d5.astype(jnp.float32), l5.astype(jnp.float32), margin)
    _check(loss_4096(d5, l5), ref5, "B=4096 bf16")

    print("KERNEL_OK")
</pallas_src>

<mosaic_0001>
module attributes {stable_mosaic.version = 11 : i64} {
  func.func @kernel(%arg0: i32, %arg1: memref<1x128xf32, #tpu.memory_space<vmem>>, %arg2: memref<1x128xf32, #tpu.memory_space<vmem>>, %arg3: memref<1x1xf32, #tpu.memory_space<vmem>>) attributes {dimension_semantics = [#tpu.dimension_semantics<arbitrary>], iteration_bounds = array<i64: 1>, scalar_prefetch = 0 : i64, scratch_operands = 0 : i64, tpu.core_type = #tpu.core_type<tc>, window_params = [{pipeline_mode = #tpu.pipeline_mode<synchronous>, transform_indices = @transform_0, window_bounds = array<i64: 1, 128>}, {pipeline_mode = #tpu.pipeline_mode<synchronous>, transform_indices = @transform_1, window_bounds = array<i64: 1, 128>}, {pipeline_mode = #tpu.pipeline_mode<synchronous>, transform_indices = @transform_2, window_bounds = array<i64: 1, 1>}]} {
    %c0 = arith.constant 0 : index
    %c0_0 = arith.constant 0 : index
    %0 = vector.load %arg1[%c0, %c0_0] : memref<1x128xf32, #tpu.memory_space<vmem>>, vector<1x128xf32>
    %c0_1 = arith.constant 0 : index
    %c0_2 = arith.constant 0 : index
    %1 = vector.load %arg2[%c0_1, %c0_2] : memref<1x128xf32, #tpu.memory_space<vmem>>, vector<1x128xf32>
    %2 = arith.mulf %0, %0 : vector<1x128xf32>
    %cst = arith.constant 2.000000e+00 : f32
    %3 = vector.broadcast %cst : f32 to vector<1x128xf32>
    %4 = arith.subf %3, %0 : vector<1x128xf32>
    %cst_3 = arith.constant 0.000000e+00 : f32
    %5 = vector.broadcast %cst_3 : f32 to vector<1x128xf32>
    %6 = arith.maximumf %4, %5 : vector<1x128xf32>
    %7 = arith.mulf %6, %6 : vector<1x128xf32>
    %8 = arith.subf %7, %2 : vector<1x128xf32>
    %9 = arith.mulf %1, %8 : vector<1x128xf32>
    %10 = arith.addf %2, %9 : vector<1x128xf32>
    %cst_4 = arith.constant 0.000000e+00 : f32
    %11 = vector.broadcast %cst_4 : f32 to vector<1x1xf32>
    %12 = vector.shape_cast %10 : vector<1x128xf32> to vector<1x1x128xf32>
    %cst_5 = arith.constant dense<0.000000e+00> : vector<1xf32>
    %13 = vector.multi_reduction <add>, %12, %cst_5 [1, 2] : vector<1x1x128xf32> to vector<1xf32>
    %14 = vector.shape_cast %13 : vector<1xf32> to vector<1x1x1xf32>
    %15 = vector.extract %14[0, 0, 0] : f32 from vector<1x1x1xf32>
    %cst_6 = arith.constant 8.000000e+00 : f32
    %16 = arith.divf %15, %cst_6 : f32
    %17 = vector.broadcast %16 : f32 to vector<1x1xf32>
    %18 = arith.addf %11, %17 : vector<1x1xf32>
    %c0_7 = arith.constant 0 : index
    %c0_8 = arith.constant 0 : index
    %19 = vector.load %arg3[%c0_7, %c0_8] : memref<1x1xf32, #tpu.memory_space<vmem>>, vector<1x1xf32>
    tpu.vector_store %arg3[%c0_7, %c0_8], %18 {strides = array<i32>} : memref<1x1xf32, #tpu.memory_space<vmem>>, vector<1x1xf32>,
    return
  }
  func.func @transform_0(%arg0: i32) -> (i32, i32) {
    %c0_i32 = arith.constant 0 : i32
    %c0_i32_0 = arith.constant 0 : i32
    %c0_i32_1 = arith.constant 0 : i32
    return %c0_i32, %c0_i32_0 : i32, i32
  }
  func.func @transform_1(%arg0: i32) -> (i32, i32) {
    %c0_i32 = arith.constant 0 : i32
    %c0_i32_0 = arith.constant 0 : i32
    %c0_i32_1 = arith.constant 0 : i32
    return %c0_i32, %c0_i32_0 : i32, i32
  }
  func.func @transform_2(%arg0: i32) -> (i32, i32) {
    %c0_i32 = arith.constant 0 : i32
    %c0_i32_0 = arith.constant 0 : i32
    %c0_i32_1 = arith.constant 0 : i32
    return %c0_i32, %c0_i32_0 : i32, i32
  }
}

</mosaic_0001>

<llo_original>
// kernel: contrastive_loss.1
$region0: #{contrastive_loss.1}
  #allocation0 [shape = 'u32[]', space=smem, size = 0x4, offset = 0x4, fixed_abs, tag = 'smem constant byte address 0x4 - core index']
  #allocation1 [shape = 'u32[72,128]{1,0:T(1,128)}', space=vmem, size = 0x9000, scoped, tag = 'internal scratch']
  %s0 = inlined_call_operand.vmem [shape: f32[1,128], index: 0, kind: input, shape index: {}]
  %s1 = inlined_call_operand.vmem [shape: f32[1,128], index: 1, kind: input, shape index: {}]
  %s2 = inlined_call_operand.hbm [shape: f32[1,1], index: 2, kind: output, shape index: {}]
  %s3 = sld [smem:[#allocation0]]
  $region18: #{contrastive_loss.1} parent=0
    _
  %s5 = ssub.s32 1, %s3
  %s6 = scalar_select 0, %s5, %s3
  $region1: #{contrastive_loss.1} parent=0
    #allocation2 [shape = 'u8[512]{0}', space=vmem, size = 0x400, scoped, tag = 'output window, operand 0, single buffered']
    #allocation3 [shape = 's32[1]{0}', space=sflag, size = 0x4, scoped, tag = 'scoped memory for contrastive_loss.1']
    %7 = vsyncpa [#allocation3], 0
    // Predicated region
    $region2: #{contrastive_loss.1} parent=1 // pred_check
      _
    $region3: #{contrastive_loss.1} parent=1 // pred_check_branch
      %9 = sbr.rel (0) target = $region5
    $region4: #{contrastive_loss.1} parent=1 // pred_region
      _
    $region5: #{contrastive_loss.1} parent=1 // pred_fallthru
      _
    // Predicated region
    $region6: #{contrastive_loss.1} parent=1 // pred_check
      _
    $region7: #{contrastive_loss.1} parent=1 // pred_check_branch
      %11 = sbr.rel (0) target = $region9
    $region8: #{contrastive_loss.1} parent=1 // pred_region
      _
    $region9: #{contrastive_loss.1} parent=1 // pred_fallthru
      _
    %v12 = vld [vmem:[%s0] sm:$0x1]
    %v13 = vld [vmem:[%s1] sm:$0x1]
    %v14 = vmul.f32 %v12, %v12
    %v15 = vsub.f32 2.0, %v12
    %v16 = vmax.f32 %v15, 0.0
    %v17 = vmul.f32 %v16, %v16
    %v18 = vsub.f32 %v17, %v14
    %v19 = vmul.f32 %v13, %v18
    %v20 = vadd.f32 %v14, %v19
    %vm21 = vcmask 1040384
    %v22 = vsel %vm21, %v20, 0.0
    %23 = vadd.xlane.f32.xlu0 %v22
    %v24 = vpop.xlane.xlu0 %23
    %v25 = vrot.slane %v24, 4
    %v26 = vadd.f32 %v24, %v25
    %v27 = vrot.slane %v26, 2
    %v28 = vadd.f32 %v26, %v27
    %v29 = vrot.slane %v28, 1
    %v30 = vadd.f32 %v28, %v29
    %s31 = vtos %v30
    %v32 = vrcp.pop 8.0
    %v33 = vmul.f32 8.0, %v32
    %v34 = vsub.f32 1.0, %v33
    %v35 = vmul.f32 %v32, %v34
    %v36 = vadd.f32 %v32, %v35
    %vm37 = vweird.f32 %v32
    %v38 = vsel %vm37, %v32, %v36
    %s39 = vtos %v38
    %s40 = smul.f32 %s31, %s39
    %v41 = vstv %s40
    %v42 = vadd.f32 %v41, 0.0
    %vm43 = vcmask 0
    %44 = vst.msk [vmem:[#allocation2] sm:$0x1] %vm43, %v42
    // Predicated region
    $region10: #{contrastive_loss.1} parent=1 // pred_check
      _
    $region11: #{contrastive_loss.1} parent=1 // pred_check_branch
      %46 = sbr.rel (0) target = $region13
    $region12: #{contrastive_loss.1} parent=1 // pred_region
      %48 = vsyncadd [#allocation3], 0
      %s50 = sshll.u32 [#allocation2], 4
      %s51 = int_to_ptr.vmem [resolvable:$true] %s50
      %s52 = sshll.u32 %s2, 4
      %s53 = int_to_ptr.hbm [resolvable:$true] %s52
      %55 = dma.vmem_to_hbm [thread:$0]  %s51, 16, %s53, [#allocation3]
    $region13: #{contrastive_loss.1} parent=1 // pred_fallthru
      _
    // Predicated region
    $region14: #{contrastive_loss.1} parent=1 // pred_check
      _
    $region15: #{contrastive_loss.1} parent=1 // pred_check_branch
      %57 = sbr.rel (0) target = $region17
    $region16: #{contrastive_loss.1} parent=1 // pred_region
      %59 = dma.done [#allocation3], 16
    $region17: #{contrastive_loss.1} parent=1 // pred_fallthru
      _
    %60 = vsyncpa [#allocation3], 1

</llo_original>
